<compile_context>
chip_gen: v5e
topology: v5e:2x2
jax: 0.10.0
libtpu: 0.0.40
codegen_flags: <defaults>
</compile_context>

<pallas_src>
import functools
import math

import jax
import jax.numpy as jnp
from jax.experimental import pallas as pl
from jax.experimental.pallas import tpu as pltpu


def _drop_path_kernel(u_ref, x_ref, o_ref, *, keep_prob, scale_by_keep):
    """u_ref: (TB, 1) f32 uniforms; x_ref/o_ref: (TB, TF) tiles of x / out."""
    # Per-sample keep mask in x.dtype (column vector), broadcast over lanes.
    keep = (u_ref[...] < jnp.float32(keep_prob)).astype(o_ref.dtype)
    if scale_by_keep and keep_prob > 0.0:
        keep = keep * jnp.asarray(1.0 / keep_prob, dtype=o_ref.dtype)
    o_ref[...] = x_ref[...] * keep


def _choose_block(B, F, itemsize, target_bytes):
    """Pick (TB, TF) obeying the (8, 128) rule with ~target_bytes per block."""
    target_elems = max(1, target_bytes // itemsize)
    # Lane (last) dim: full row if it fits, else a large multiple of 128.
    row_budget = max(1, target_elems // 8)
    if F <= max(row_budget, 128):
        tf = F                                    # full dim -> always legal
    else:
        tf = max(128, (row_budget // 128) * 128)  # multiple of 128 -> legal
    # Sublane (batch) dim: fill the remaining budget; full B or multiple of 8.
    rows = max(1, target_elems // tf)
    if B <= rows or B <= 8:
        tb = B                                    # full dim -> always legal
    else:
        tb = max(8, (min(rows, B) // 8) * 8)      # multiple of 8 -> legal
    return tb, tf


def drop_path(x, key, drop_prob: float = 0.0, training: bool = False,
              scale_by_keep: bool = True, block_bytes: int = 2 << 20):
    """JAX/Pallas equivalent of timm's drop_path (as used in CrossFormer)."""
    if drop_prob == 0.0 or not training:
        return x

    keep_prob = 1.0 - drop_prob
    orig_shape = x.shape
    B = orig_shape[0]
    F = int(math.prod(orig_shape[1:])) if x.ndim > 1 else 1

    # Lane-dense 2-D view: (B, F) (contiguous reshape; no data movement).
    x2 = x.reshape(B, F)

    # Per-sample uniforms; bernoulli threshold + rescale happen in-kernel.
    u = jax.random.uniform(key, (B, 1), dtype=jnp.float32)

    tb, tf = _choose_block(B, F, x.dtype.itemsize, block_bytes)
    grid = (pl.cdiv(B, tb), pl.cdiv(F, tf))

    kernel = functools.partial(
        _drop_path_kernel, keep_prob=keep_prob, scale_by_keep=scale_by_keep)

    itemsize = x.dtype.itemsize
    cost = pl.CostEstimate(
        flops=2 * B * F,                        # compare+mul order of magnitude
        transcendentals=0,
        bytes_accessed=2 * B * F * itemsize + B * 4,
    )

    out = pl.pallas_call(
        kernel,
        out_shape=jax.ShapeDtypeStruct((B, F), x.dtype),
        grid=grid,
        in_specs=[
            pl.BlockSpec((tb, 1), lambda i, j: (i, 0)),    # per-sample uniforms
            pl.BlockSpec((tb, tf), lambda i, j: (i, j)),   # x tile
        ],
        out_specs=pl.BlockSpec((tb, tf), lambda i, j: (i, j)),
        compiler_params=pltpu.CompilerParams(
            dimension_semantics=("parallel", "parallel")),
        cost_estimate=cost,
    )(u, x2)

    return out.reshape(orig_shape)


class DropPath:
    """Drop paths (stochastic depth) per sample."""

    def __init__(self, drop_prob: float = 0.0, scale_by_keep: bool = True):
        self.drop_prob = drop_prob
        self.scale_by_keep = scale_by_keep
        self.training = True  # torch modules default to training mode

    def __call__(self, x, key):
        return drop_path(x, key, self.drop_prob, self.training,
                         self.scale_by_keep)


if __name__ == "__main__":
    key = jax.random.PRNGKey(0)
    kx, kmask, kx2, kmask2 = jax.random.split(key, 4)

    # Case 1: ViT-like token tensor (batch=2, tokens=8, channels=32), f32.
    B, N, C = 2, 8, 32
    x = jax.random.normal(kx, (B, N, C), dtype=jnp.float32)

    module = DropPath(drop_prob=0.25, scale_by_keep=True)
    module.training = True
    out = jax.block_until_ready(module(x, kmask))

    keep_prob = 1.0 - module.drop_prob
    u = jax.random.uniform(kmask, (B, 1), dtype=jnp.float32)
    keep = (u < jnp.float32(keep_prob)).astype(x.dtype)
    scale = keep * jnp.asarray(1.0 / keep_prob, x.dtype)
    ref = x * scale[:, :, None]
    assert out.shape == x.shape and out.dtype == x.dtype
    assert jnp.allclose(out, ref, atol=1e-6), "mismatch vs reference (case 1)"

    # Case 2: non-128 channel width, multi-block grid (tiny block budget to
    # exercise the tiled/partial-block path at small shapes).
    B2, N2, C2 = 4, 10, 48
    x2 = jax.random.normal(kx2, (B2, N2, C2), dtype=jnp.float32)
    out2 = jax.block_until_ready(
        drop_path(x2, kmask2, drop_prob=0.5, training=True, block_bytes=1024))
    u2 = jax.random.uniform(kmask2, (B2, 1), dtype=jnp.float32)
    keep2 = (u2 < jnp.float32(0.5)).astype(x2.dtype)
    scale2 = keep2 * jnp.asarray(2.0, x2.dtype)
    ref2 = x2 * scale2[:, :, None]
    assert jnp.allclose(out2, ref2, atol=1e-6), "mismatch vs reference (case 2)"

    # Case 3: bf16 path (mask built & applied in x.dtype, like timm).
    xb = jax.random.normal(kx2, (B, N, C), dtype=jnp.bfloat16)
    outb = jax.block_until_ready(
        drop_path(xb, kmask, drop_prob=0.25, training=True))
    keepb = (u < jnp.float32(keep_prob)).astype(jnp.bfloat16)
    scaleb = keepb * jnp.asarray(1.0 / keep_prob, jnp.bfloat16)
    refb = xb * scaleb[:, :, None]
    assert outb.dtype == jnp.bfloat16
    assert jnp.allclose(outb.astype(jnp.float32), refb.astype(jnp.float32),
                        atol=1e-2), "mismatch vs reference (case 3, bf16)"

    # Eval mode (or drop_prob=0) is identity, as in torch.
    module.training = False
    out_eval = jax.block_until_ready(module(x, kmask))
    assert jnp.array_equal(out_eval, x)

    print("KERNEL_OK")
</pallas_src>

<mosaic_0001>
module attributes {stable_mosaic.version = 11 : i64} {
  func.func @_drop_path_kernel(%arg0: i32, %arg1: i32, %arg2: memref<2x1xf32, #tpu.memory_space<vmem>>, %arg3: memref<2x256xf32, #tpu.memory_space<vmem>>, %arg4: memref<2x256xf32, #tpu.memory_space<vmem>>) attributes {dimension_semantics = [#tpu.dimension_semantics<parallel>, #tpu.dimension_semantics<parallel>], iteration_bounds = array<i64: 1, 1>, scalar_prefetch = 0 : i64, scratch_operands = 0 : i64, tpu.core_type = #tpu.core_type<tc>, window_params = [{transform_indices = @transform_0, window_bounds = array<i64: 2, 1>}, {transform_indices = @transform_1, window_bounds = array<i64: 2, 256>}, {transform_indices = @transform_2, window_bounds = array<i64: 2, 256>}]} {
    %c0 = arith.constant 0 : index
    %c0_0 = arith.constant 0 : index
    %0 = vector.load %arg2[%c0, %c0_0] : memref<2x1xf32, #tpu.memory_space<vmem>>, vector<2x1xf32>
    %cst = arith.constant 7.500000e-01 : f32
    %1 = vector.broadcast %cst : f32 to vector<2x1xf32>
    %2 = arith.cmpf olt, %0, %1 : vector<2x1xf32>
    %3 = arith.extui %2 : vector<2x1xi1> to vector<2x1xi32>
    %4 = arith.sitofp %3 : vector<2x1xi32> to vector<2x1xf32>
    %cst_1 = arith.constant 1.33333337 : f32
    %5 = vector.broadcast %cst_1 : f32 to vector<2x1xf32>
    %6 = arith.mulf %4, %5 : vector<2x1xf32>
    %c0_2 = arith.constant 0 : index
    %c0_3 = arith.constant 0 : index
    %7 = vector.load %arg3[%c0_2, %c0_3] : memref<2x256xf32, #tpu.memory_space<vmem>>, vector<2x256xf32>
    %8 = vector.broadcast %6 : vector<2x1xf32> to vector<2x256xf32>
    %9 = arith.mulf %7, %8 : vector<2x256xf32>
    %c0_4 = arith.constant 0 : index
    %c0_5 = arith.constant 0 : index
    %10 = vector.load %arg4[%c0_4, %c0_5] : memref<2x256xf32, #tpu.memory_space<vmem>>, vector<2x256xf32>
    tpu.vector_store %arg4[%c0_4, %c0_5], %9 {strides = array<i32>} : memref<2x256xf32, #tpu.memory_space<vmem>>, vector<2x256xf32>,
    return
  }
  func.func @transform_0(%arg0: i32, %arg1: i32) -> (i32, i32) {
    %c0_i32 = arith.constant 0 : i32
    %c0_i32_0 = arith.constant 0 : i32
    return %arg0, %c0_i32 : i32, i32
  }
  func.func @transform_1(%arg0: i32, %arg1: i32) -> (i32, i32) {
    %c0_i32 = arith.constant 0 : i32
    return %arg0, %arg1 : i32, i32
  }
  func.func @transform_2(%arg0: i32, %arg1: i32) -> (i32, i32) {
    %c0_i32 = arith.constant 0 : i32
    return %arg0, %arg1 : i32, i32
  }
}

</mosaic_0001>

<llo_original>
// kernel: tpu_custom_call.1
$region0: #{tpu_custom_call.1}
  #allocation0 [shape = 'u32[]', space=smem, size = 0x4, offset = 0x4, fixed_abs, tag = 'smem constant byte address 0x4 - core index']
  #allocation1 [shape = 'u32[72,128]{1,0:T(1,128)}', space=vmem, size = 0x9000, scoped, tag = 'internal scratch']
  %s0 = inlined_call_operand.vmem [shape: f32[2,1], index: 0, kind: input, shape index: {}]
  %s1 = inlined_call_operand.hbm [shape: f32[2,256], index: 1, kind: input, shape index: {}]
  %s2 = inlined_call_operand.hbm [shape: f32[2,256], index: 2, kind: output, shape index: {}]
  %s3 = sld [smem:[#allocation0]]
  $region22: #{tpu_custom_call.1} parent=0
    _
  %s5 = ssub.s32 1, %s3
  %s6 = scalar_select 0, %s5, %s3
  $region1: #{tpu_custom_call.1} parent=0
    #allocation2 [shape = 'u8[2048]{0}', space=vmem, size = 0x800, scoped, tag = 'input window, operand 1, single buffered']
    #allocation3 [shape = 's32[1]{0}', space=sflag, size = 0x4, scoped, tag = 'scoped memory for tpu_custom_call.1']
    #allocation4 [shape = 's32[1]{0}', space=sflag, size = 0x4, scoped, tag = 'scoped memory for tpu_custom_call.1']
    #allocation5 [shape = 'u8[2048]{0}', space=vmem, size = 0x800, scoped, tag = 'output window, operand 0, single buffered']
    %7 = vsyncpa [#allocation3], 0
    %8 = vsyncpa [#allocation4], 0
    // Predicated region
    $region2: #{tpu_custom_call.1} parent=1 // pred_check
      _
    $region3: #{tpu_custom_call.1} parent=1 // pred_check_branch
      %10 = sbr.rel (0) target = $region5
    $region4: #{tpu_custom_call.1} parent=1 // pred_region
      _
    $region5: #{tpu_custom_call.1} parent=1 // pred_fallthru
      _
    // Predicated region
    $region6: #{tpu_custom_call.1} parent=1 // pred_check
      _
    $region7: #{tpu_custom_call.1} parent=1 // pred_check_branch
      %12 = sbr.rel (0) target = $region9
    $region8: #{tpu_custom_call.1} parent=1 // pred_region
      %14 = vsyncadd [#allocation3], 0
      %s16 = sshll.u32 %s1, 4
      %s17 = int_to_ptr.hbm [resolvable:$true] %s16
      %s18 = sshll.u32 [#allocation2], 4
      %s19 = int_to_ptr.vmem [resolvable:$true] %s18
      %21 = dma.hbm_to_vmem [thread:$0]  %s17, 64, %s19, [#allocation3]
    $region9: #{tpu_custom_call.1} parent=1 // pred_fallthru
      _
    // Predicated region
    $region10: #{tpu_custom_call.1} parent=1 // pred_check
      _
    $region11: #{tpu_custom_call.1} parent=1 // pred_check_branch
      %23 = sbr.rel (0) target = $region13
    $region12: #{tpu_custom_call.1} parent=1 // pred_region
      %25 = dma.done [#allocation3], 64
    $region13: #{tpu_custom_call.1} parent=1 // pred_fallthru
      _
    %v26 = vld [vmem:[%s0] sm:$0x3]
    %vm27 = vcmp.lt.f32.partialorder %v26, 0.75
    %v28 = vsel %vm27, 1, 0
    %v29 = vcvt.s32.f32 %v28
    %v30 = vmul.f32 %v29, 1.3333334
    %v31 = vld [vmem:[#allocation2] sm:$0xf]
    %33 = vset.pattern.permute.xlu0 0
    %34 = vperm.xlu0 %33, %v30
    %v35 = vpop.permute.xlu0 %34
    %v37 = vunpack.c.l.s4 269488144
    %v38 = vunpack.c.0.s8 %v37
    %v39 = vperm.slane %v35, %v38
    %v41 = vmul.f32 %v31, %v39
    %42 = vst [vmem:[#allocation5] sm:$0xf] %v41
    // Predicated region
    $region14: #{tpu_custom_call.1} parent=1 // pred_check
      _
    $region15: #{tpu_custom_call.1} parent=1 // pred_check_branch
      %44 = sbr.rel (0) target = $region17
    $region16: #{tpu_custom_call.1} parent=1 // pred_region
      %46 = vsyncadd [#allocation4], 0
      %s48 = sshll.u32 [#allocation5], 4
      %s49 = int_to_ptr.vmem [resolvable:$true] %s48
      %s50 = sshll.u32 %s2, 4
      %s51 = int_to_ptr.hbm [resolvable:$true] %s50
      %53 = dma.vmem_to_hbm [thread:$0]  %s49, 64, %s51, [#allocation4]
    $region17: #{tpu_custom_call.1} parent=1 // pred_fallthru
      _
    // Predicated region
    $region18: #{tpu_custom_call.1} parent=1 // pred_check
      _
    $region19: #{tpu_custom_call.1} parent=1 // pred_check_branch
      %55 = sbr.rel (0) target = $region21
    $region20: #{tpu_custom_call.1} parent=1 // pred_region
      %57 = dma.done [#allocation4], 64
    $region21: #{tpu_custom_call.1} parent=1 // pred_fallthru
      _
    %58 = vsyncpa [#allocation3], 1
    %59 = vsyncpa [#allocation4], 1

</llo_original>
